<compile_context>
chip_gen: v5e
topology: v5e:2x2
jax: 0.10.0
libtpu: 0.0.40
codegen_flags: <defaults>
</compile_context>

<pallas_src>
import functools

import jax
import jax.numpy as jnp
from jax import lax
from jax.experimental import pallas as pl
from jax.experimental.pallas import tpu as pltpu


# ----------------------------------------------------------------------------
# Kernels
# ----------------------------------------------------------------------------

def _linear_kernel_inplace(x_ref, w_ref, b_ref, o_ref):
    """f32 output: accumulate directly into the resident output block."""
    k = pl.program_id(2)
    part = lax.dot_general(
        x_ref[...].astype(w_ref.dtype), w_ref[...],
        dimension_numbers=(((1,), (1,)), ((), ())),   # contract on D (K axis)
        preferred_element_type=jnp.float32)

    @pl.when(k == 0)
    def _():
        o_ref[...] = part + b_ref[...]        # bias folded into first K step

    @pl.when(k > 0)
    def _():
        o_ref[...] += part


def _linear_kernel_scratch(x_ref, w_ref, b_ref, o_ref, acc_ref):
    """Sub-f32 output: f32 VMEM accumulator, cast on the final K step."""
    k = pl.program_id(2)
    part = lax.dot_general(
        x_ref[...].astype(w_ref.dtype), w_ref[...],
        dimension_numbers=(((1,), (1,)), ((), ())),
        preferred_element_type=jnp.float32)

    @pl.when(k == 0)
    def _():
        acc_ref[...] = part + b_ref[...]

    @pl.when(k > 0)
    def _():
        acc_ref[...] += part

    @pl.when(k == pl.num_programs(2) - 1)
    def _():
        o_ref[...] = acc_ref[...].astype(o_ref.dtype)


# ----------------------------------------------------------------------------
# Helpers
# ----------------------------------------------------------------------------

def _round_up(v, m):
    return ((v + m - 1) // m) * m


def _pick_tile(dim, cap, gran):
    """Largest multiple of `gran` that divides `dim` (dim % gran == 0) and <= cap."""
    cap = max(gran, min(cap, dim))
    cap = (cap // gran) * gran
    for t in range(cap, gran - 1, -gran):
        if dim % t == 0:
            return t
    return gran


def _vmem_budget():
    """(block_budget_bytes, vmem_limit_bytes) per TPU generation."""
    try:
        vmem_cap = int(pltpu.get_tpu_info().vmem_capacity_bytes)
    except Exception:
        vmem_cap = 64 * 1024 * 1024            # conservative (v7x-sized)
    if vmem_cap >= 100 * 1024 * 1024:          # v5e / v6e: 128 MiB physical
        return 72 * 1024 * 1024, 96 * 1024 * 1024
    # v7x: 64 MiB physical per TC -- keep double-buffered blocks <= ~26 MiB.
    return 26 * 1024 * 1024, 44 * 1024 * 1024


# ----------------------------------------------------------------------------
# Parameter preparation (ONE-TIME, init) and forward (hot path)
# ----------------------------------------------------------------------------

def prepare_linear_params(weight, bias, *, compute_dtype=jnp.bfloat16):
    """One-time cast + pad of the frozen classifier params to (Np, Dp)/(1, Np).

    Done once at init so the per-call hot path never re-materializes the
    weight in HBM.  Padding is to hardware granularity (128 lanes) only.
    """
    N, D = weight.shape
    Np = _round_up(N, 128)
    Dp = _round_up(D, 128)
    w_p = weight.astype(compute_dtype)
    if (Np, Dp) != (N, D):
        w_p = jnp.pad(w_p, ((0, Np - N), (0, Dp - D)))
    b_p = bias.astype(jnp.float32)
    if Np != N:
        b_p = jnp.pad(b_p, (0, Np - N))
    return w_p, b_p.reshape(1, Np)


def linear_classifier_forward(x, w_p, b_p, *, num_labels):
    """x: (B, ...) any trailing shape; w_p/(b_p): prepared padded params."""
    B = x.shape[0]
    x_flat = x.reshape(B, -1)                       # glue: torch .view(B, -1)
    D = x_flat.shape[1]
    Np, Dp = w_p.shape
    assert Dp >= D and Dp - D < 128, f"dim mismatch: weight D={Dp} vs x D={D}"
    out_dtype = x_flat.dtype
    acc_inplace = jnp.dtype(out_dtype) == jnp.dtype(jnp.float32)

    # --- Pad x only as strictly needed (batch to 16, D to 128). ------------
    Bp = _round_up(max(B, 1), 16)
    x_p = x_flat
    if (Bp, Dp) != (B, D):
        x_p = jnp.pad(x_flat, ((0, Bp - B), (0, Dp - D)))

    x_bytes = jnp.dtype(x_p.dtype).itemsize
    w_bytes = jnp.dtype(w_p.dtype).itemsize
    out_bytes = jnp.dtype(out_dtype).itemsize
    block_budget, vmem_limit = _vmem_budget()

    # --- Tile selection -----------------------------------------------------
    # N tile: keep the full (padded) class axis resident when it fits so x is
    # streamed from HBM exactly once and output stores are lane-dense.
    TN = _pick_tile(Np, 2048, 128)

    # M tile: ~512 rows, but keep >= 2 blocks on the parallel i axis when the
    # batch allows it (both TensorCores fed on v7x).
    tm_cap = 512
    if Bp >= 32:
        tm_cap = min(tm_cap, max(16, (Bp // 2) // 16 * 16))
    TM = _pick_tile(Bp, tm_cap, 16)

    # K tile: spend the remaining VMEM budget on deeper K (fewer accumulator
    # read-modify-write passes; ideally a single K step).
    fixed = 2 * TM * TN * out_bytes + 2 * TN * 4        # out dbl-buf + bias
    if not acc_inplace:
        fixed += TM * TN * 4                             # f32 acc scratch
    per_tk = 2 * TM * x_bytes + 2 * TN * w_bytes         # x + W dbl-buffers
    tk_cap = max(128, (block_budget - fixed) // per_tk)
    TK = _pick_tile(Dp, tk_cap, 128)

    grid = (Bp // TM, Np // TN, Dp // TK)
    gi, gj, gk = grid

    if acc_inplace:
        kernel = _linear_kernel_inplace
        scratch = ()
    else:
        kernel = _linear_kernel_scratch
        scratch = (pltpu.VMEM((TM, TN), jnp.float32),)

    out_p = pl.pallas_call(
        kernel,
        out_shape=jax.ShapeDtypeStruct((Bp, Np), out_dtype),
        grid_spec=pltpu.PrefetchScalarGridSpec(
            num_scalar_prefetch=0,
            grid=grid,
            in_specs=[
                pl.BlockSpec((TM, TK), lambda i, j, k: (i, k)),   # x tile
                pl.BlockSpec((TN, TK), lambda i, j, k: (j, k)),   # W (N, D) tile
                pl.BlockSpec((1, TN), lambda i, j, k: (0, j)),    # bias tile
            ],
            out_specs=pl.BlockSpec((TM, TN), lambda i, j, k: (i, j)),
            scratch_shapes=scratch,
        ),
        compiler_params=pltpu.CompilerParams(
            dimension_semantics=("parallel", "parallel", "arbitrary"),
            vmem_limit_bytes=vmem_limit),
        cost_estimate=pl.CostEstimate(
            flops=2 * Bp * Dp * Np,
            transcendentals=0,
            # Actual re-streaming: x read gj times, W read gi times.
            bytes_accessed=gj * Bp * Dp * x_bytes
                           + gi * Np * Dp * w_bytes
                           + Np * 4 + Bp * Np * out_bytes),
    )(x_p, w_p, b_p)

    return out_p[:B, :num_labels]


# ----------------------------------------------------------------------------
# Demo / self-test
# ----------------------------------------------------------------------------

if __name__ == "__main__":
    key = jax.random.PRNGKey(0)
    kx, kw = jax.random.split(key)

    # Small frozen-feature input, NCHW-style: (B, C, H, W) = (2, 4, 16, 16)
    B, C, H, W = 2, 4, 16, 16
    dim = C * H * W                  # 1024
    num_labels = 128                 # small stand-in for 1000

    x = jax.random.normal(kx, (B, C, H, W), dtype=jnp.float32)

    # Deterministic parameter init matching the PyTorch module's __init__:
    # weight ~ Normal(0, 0.01), bias = 0.
    weight = 0.01 * jax.random.normal(kw, (num_labels, dim), dtype=jnp.float32)
    bias = jnp.zeros((num_labels,), dtype=jnp.float32)

    # One-time (init) parameter preparation -- off the hot path.
    w_p, b_p = prepare_linear_params(weight, bias)

    y = linear_classifier_forward(x, w_p, b_p, num_labels=num_labels)
    jax.block_until_ready(y)

    assert y.shape == (B, num_labels)

    # Reference in the same bf16-input / f32-accumulate regime as the kernel.
    x_bf = x.reshape(B, -1).astype(jnp.bfloat16).astype(jnp.float32)
    w_bf = weight.astype(jnp.bfloat16).astype(jnp.float32)
    y_ref_bf = x_bf @ w_bf.T + bias
    assert jnp.allclose(y.astype(jnp.float32), y_ref_bf, atol=2e-3, rtol=2e-3)

    # Looser sanity check against the full-f32 PyTorch-equivalent math.
    y_ref_f32 = x.reshape(B, -1) @ weight.T + bias
    assert jnp.allclose(y.astype(jnp.float32), y_ref_f32, atol=2e-2, rtol=2e-2)

    print("KERNEL_OK")
</pallas_src>

<mosaic_0001>
module attributes {stable_mosaic.version = 11 : i64} {
  func.func @_linear_kernel_inplace(%arg0: i32, %arg1: i32, %arg2: i32, %arg3: memref<16x1024xf32, #tpu.memory_space<vmem>>, %arg4: memref<128x1024xbf16, #tpu.memory_space<vmem>>, %arg5: memref<1x128xf32, #tpu.memory_space<vmem>>, %arg6: memref<16x128xf32, #tpu.memory_space<vmem>>) attributes {dimension_semantics = [#tpu.dimension_semantics<parallel>, #tpu.dimension_semantics<parallel>, #tpu.dimension_semantics<arbitrary>], iteration_bounds = array<i64: 1, 1, 1>, scalar_prefetch = 0 : i64, scratch_operands = 0 : i64, tpu.core_type = #tpu.core_type<tc>, window_params = [{transform_indices = @transform_0, window_bounds = array<i64: 16, 1024>}, {transform_indices = @transform_1, window_bounds = array<i64: 128, 1024>}, {transform_indices = @transform_2, window_bounds = array<i64: 1, 128>}, {transform_indices = @transform_3, window_bounds = array<i64: 16, 128>}]} {
    %c0 = arith.constant 0 : index
    %c0_0 = arith.constant 0 : index
    %0 = vector.load %arg3[%c0, %c0_0] : memref<16x1024xf32, #tpu.memory_space<vmem>>, vector<16x1024xf32>
    %1 = arith.truncf %0 : vector<16x1024xf32> to vector<16x1024xbf16>
    %c0_1 = arith.constant 0 : index
    %c0_2 = arith.constant 0 : index
    %2 = vector.load %arg4[%c0_1, %c0_2] : memref<128x1024xbf16, #tpu.memory_space<vmem>>, vector<128x1024xbf16>
    %cst = arith.constant dense<0.000000e+00> : vector<16x128xf32>
    %3 = tpu.matmul %1, %2, %cst {dimension_numbers = #tpu.dot_dimension_numbers<[1], [1], [0], [0], [0, 0, 1, 0], [], []>} : vector<16x1024xbf16>, vector<128x1024xbf16>, vector<16x128xf32> -> vector<16x128xf32>
    %c0_i32 = arith.constant 0 : i32
    %4 = arith.cmpi eq, %arg2, %c0_i32 : i32
    %5 = arith.extui %4 : i1 to i32
    %c0_i32_3 = arith.constant 0 : i32
    %6 = arith.cmpi ne, %5, %c0_i32_3 : i32
    scf.if %6 {
      %c0_6 = arith.constant 0 : index
      %c0_7 = arith.constant 0 : index
      %10 = vector.load %arg5[%c0_6, %c0_7] : memref<1x128xf32, #tpu.memory_space<vmem>>, vector<1x128xf32>
      %11 = vector.broadcast %10 : vector<1x128xf32> to vector<16x128xf32>
      %12 = arith.addf %3, %11 : vector<16x128xf32>
      %c0_8 = arith.constant 0 : index
      %c0_9 = arith.constant 0 : index
      %13 = vector.load %arg6[%c0_8, %c0_9] : memref<16x128xf32, #tpu.memory_space<vmem>>, vector<16x128xf32>
      tpu.vector_store %arg6[%c0_8, %c0_9], %12 {strides = array<i32>} : memref<16x128xf32, #tpu.memory_space<vmem>>, vector<16x128xf32>,
    } else {
    }
    %c0_i32_4 = arith.constant 0 : i32
    %7 = arith.cmpi sgt, %arg2, %c0_i32_4 : i32
    %8 = arith.extui %7 : i1 to i32
    %c0_i32_5 = arith.constant 0 : i32
    %9 = arith.cmpi ne, %8, %c0_i32_5 : i32
    scf.if %9 {
      %c0_6 = arith.constant 0 : index
      %c0_7 = arith.constant 0 : index
      %10 = vector.load %arg6[%c0_6, %c0_7] : memref<16x128xf32, #tpu.memory_space<vmem>>, vector<16x128xf32>
      %11 = arith.addf %10, %3 : vector<16x128xf32>
      %c0_8 = arith.constant 0 : index
      %c0_9 = arith.constant 0 : index
      %12 = vector.load %arg6[%c0_8, %c0_9] : memref<16x128xf32, #tpu.memory_space<vmem>>, vector<16x128xf32>
      tpu.vector_store %arg6[%c0_8, %c0_9], %11 {strides = array<i32>} : memref<16x128xf32, #tpu.memory_space<vmem>>, vector<16x128xf32>,
    } else {
    }
    return
  }
  func.func @transform_0(%arg0: i32, %arg1: i32, %arg2: i32) -> (i32, i32) {
    %c0_i32 = arith.constant 0 : i32
    return %arg0, %arg2 : i32, i32
  }
  func.func @transform_1(%arg0: i32, %arg1: i32, %arg2: i32) -> (i32, i32) {
    %c0_i32 = arith.constant 0 : i32
    return %arg1, %arg2 : i32, i32
  }
  func.func @transform_2(%arg0: i32, %arg1: i32, %arg2: i32) -> (i32, i32) {
    %c0_i32 = arith.constant 0 : i32
    %c0_i32_0 = arith.constant 0 : i32
    return %c0_i32, %arg1 : i32, i32
  }
  func.func @transform_3(%arg0: i32, %arg1: i32, %arg2: i32) -> (i32, i32) {
    %c0_i32 = arith.constant 0 : i32
    return %arg0, %arg1 : i32, i32
  }
}

</mosaic_0001>

<llo_original>
// kernel: tpu_custom_call.1
$region0: #{tpu_custom_call.1}
  #allocation0 [shape = 'u32[]', space=smem, size = 0x4, offset = 0x4, fixed_abs, tag = 'smem constant byte address 0x4 - core index']
  #allocation1 [shape = 'u32[72,128]{1,0:T(1,128)}', space=vmem, size = 0x9000, scoped, tag = 'internal scratch']
  %s0 = inlined_call_operand.hbm [shape: f32[16,1024], index: 0, kind: input, shape index: {}]
  %s1 = inlined_call_operand.hbm [shape: bf16[128,1024], index: 1, kind: input, shape index: {}]
  %s2 = inlined_call_operand.vmem [shape: f32[1,128], index: 2, kind: input, shape index: {}]
  %s3 = inlined_call_operand.hbm [shape: f32[16,128], index: 3, kind: output, shape index: {}]
  %s4 = sld [smem:[#allocation0]]
  $region38: #{tpu_custom_call.1} parent=0
    _
  %s6 = ssub.s32 1, %s4
  %s7 = scalar_select 0, %s6, %s4
  $region1: #{tpu_custom_call.1} parent=0
    #allocation2 [shape = 'u8[65536]{0}', space=vmem, size = 0x10000, scoped, tag = 'input window, operand 0, single buffered']
    #allocation3 [shape = 's32[1]{0}', space=sflag, size = 0x4, scoped, tag = 'scoped memory for tpu_custom_call.1']
    #allocation4 [shape = 's32[1]{0}', space=sflag, size = 0x4, scoped, tag = 'scoped memory for tpu_custom_call.1']
    #allocation5 [shape = 'u8[262144]{0}', space=vmem, size = 0x40000, scoped, tag = 'input window, operand 1, single buffered']
    #allocation6 [shape = 's32[1]{0}', space=sflag, size = 0x4, scoped, tag = 'scoped memory for tpu_custom_call.1']
    #allocation7 [shape = 'u8[8192]{0}', space=vmem, size = 0x2000, scoped, tag = 'output window, operand 0, single buffered']
    %8 = vsyncpa [#allocation3], 0
    %9 = vsyncpa [#allocation6], 0
    %10 = vsyncpa [#allocation4], 0
    // Predicated region
    $region2: #{tpu_custom_call.1} parent=1 // pred_check
      _
    $region3: #{tpu_custom_call.1} parent=1 // pred_check_branch
      %12 = sbr.rel (0) target = $region5
    $region4: #{tpu_custom_call.1} parent=1 // pred_region
      %14 = vsyncadd [#allocation3], 0
      %s15 = sshll.u32 %s0, 4
      %s16 = int_to_ptr.hbm [resolvable:$true] %s15
      %s17 = sshll.u32 [#allocation2], 4
      %s18 = int_to_ptr.vmem [resolvable:$true] %s17
      %23 = dma.hbm_to_vmem [thread:$0]  %s16, 2048, %s18, [#allocation3], 1024, 1024, 64
    $region5: #{tpu_custom_call.1} parent=1 // pred_fallthru
      _
    // Predicated region
    $region6: #{tpu_custom_call.1} parent=1 // pred_check
      _
    $region7: #{tpu_custom_call.1} parent=1 // pred_check_branch
      %25 = sbr.rel (0) target = $region9
    $region8: #{tpu_custom_call.1} parent=1 // pred_region
      %27 = vsyncadd [#allocation6], 0
      %s28 = sshll.u32 %s1, 4
      %s29 = int_to_ptr.hbm [resolvable:$true] %s28
      %s30 = sshll.u32 [#allocation5], 4
      %s31 = int_to_ptr.vmem [resolvable:$true] %s30
      %36 = dma.hbm_to_vmem [thread:$0]  %s29, 8192, %s31, [#allocation6], 512, 512, 32
    $region9: #{tpu_custom_call.1} parent=1 // pred_fallthru
      _
    // Predicated region
    $region10: #{tpu_custom_call.1} parent=1 // pred_check
      _
    $region11: #{tpu_custom_call.1} parent=1 // pred_check_branch
      %38 = sbr.rel (0) target = $region13
    $region12: #{tpu_custom_call.1} parent=1 // pred_region
      _
    $region13: #{tpu_custom_call.1} parent=1 // pred_fallthru
      _
    // Predicated region
    $region14: #{tpu_custom_call.1} parent=1 // pred_check
      _
    $region15: #{tpu_custom_call.1} parent=1 // pred_check_branch
      %40 = sbr.rel (0) target = $region17
    $region16: #{tpu_custom_call.1} parent=1 // pred_region
      %42 = dma.done [#allocation3], 2048
    $region17: #{tpu_custom_call.1} parent=1 // pred_fallthru
      _
    // Predicated region
    $region18: #{tpu_custom_call.1} parent=1 // pred_check
      _
    $region19: #{tpu_custom_call.1} parent=1 // pred_check_branch
      %44 = sbr.rel (0) target = $region21
    $region20: #{tpu_custom_call.1} parent=1 // pred_region
      %46 = dma.done [#allocation6], 8192
    $region21: #{tpu_custom_call.1} parent=1 // pred_fallthru
      _
    %v47 = vld [vmem:[#allocation2] sm:$0xff]
    %v48 = vld [vmem:[#allocation2 + $0x8] sm:$0xff]
    %v49 = vld [vmem:[#allocation2 + $0x10] sm:$0xff]
    %v50 = vld [vmem:[#allocation2 + $0x18] sm:$0xff]
    %v51 = vld [vmem:[#allocation2 + $0x20] sm:$0xff]
    %v52 = vld [vmem:[#allocation2 + $0x28] sm:$0xff]
    %v53 = vld [vmem:[#allocation2 + $0x30] sm:$0xff]
    %v54 = vld [vmem:[#allocation2 + $0x38] sm:$0xff]
    %v55 = vld [vmem:[#allocation2 + $0x40] sm:$0xff]
    %v56 = vld [vmem:[#allocation2 + $0x48] sm:$0xff]
    %v57 = vld [vmem:[#allocation2 + $0x50] sm:$0xff]
    %v58 = vld [vmem:[#allocation2 + $0x58] sm:$0xff]
    %v59 = vld [vmem:[#allocation2 + $0x60] sm:$0xff]
    %v60 = vld [vmem:[#allocation2 + $0x68] sm:$0xff]
    %v61 = vld [vmem:[#allocation2 + $0x70] sm:$0xff]
    %v62 = vld [vmem:[#allocation2 + $0x78] sm:$0xff]
    %v63 = vpack.c.bf16 %v55, %v47
    %v64 = vpack.c.bf16 %v56, %v48
    %v65 = vpack.c.bf16 %v57, %v49
    %v66 = vpack.c.bf16 %v58, %v50
    %v67 = vpack.c.bf16 %v59, %v51
    %v68 = vpack.c.bf16 %v60, %v52
    %v69 = vpack.c.bf16 %v61, %v53
    %v70 = vpack.c.bf16 %v62, %v54
    %v71 = vld [vmem:[#allocation5] sm:$0xff]
    %v72 = vld [vmem:[#allocation5 + $0x8] sm:$0xff]
    %v73 = vld [vmem:[#allocation5 + $0x10] sm:$0xff]
    %v74 = vld [vmem:[#allocation5 + $0x18] sm:$0xff]
    %v75 = vld [vmem:[#allocation5 + $0x20] sm:$0xff]
    %v76 = vld [vmem:[#allocation5 + $0x28] sm:$0xff]
    %v77 = vld [vmem:[#allocation5 + $0x30] sm:$0xff]
    %v78 = vld [vmem:[#allocation5 + $0x38] sm:$0xff]
    %v79 = vld [vmem:[#allocation5 + $0x40] sm:$0xff]
    %v80 = vld [vmem:[#allocation5 + $0x48] sm:$0xff]
    %v81 = vld [vmem:[#allocation5 + $0x50] sm:$0xff]
    %v82 = vld [vmem:[#allocation5 + $0x58] sm:$0xff]
    %v83 = vld [vmem:[#allocation5 + $0x60] sm:$0xff]
    %v84 = vld [vmem:[#allocation5 + $0x68] sm:$0xff]
    %v85 = vld [vmem:[#allocation5 + $0x70] sm:$0xff]
    %v86 = vld [vmem:[#allocation5 + $0x78] sm:$0xff]
    %v87 = vld [vmem:[#allocation5 + $0x80] sm:$0xff]
    %v88 = vld [vmem:[#allocation5 + $0x88] sm:$0xff]
    %v89 = vld [vmem:[#allocation5 + $0x90] sm:$0xff]
    %v90 = vld [vmem:[#allocation5 + $0x98] sm:$0xff]
    %v91 = vld [vmem:[#allocation5 + $0xa0] sm:$0xff]
    %v92 = vld [vmem:[#allocation5 + $0xa8] sm:$0xff]
    %v93 = vld [vmem:[#allocation5 + $0xb0] sm:$0xff]
    %v94 = vld [vmem:[#allocation5 + $0xb8] sm:$0xff]
    %v95 = vld [vmem:[#allocation5 + $0xc0] sm:$0xff]
    %v96 = vld [vmem:[#allocation5 + $0xc8] sm:$0xff]
    %v97 = vld [vmem:[#allocation5 + $0xd0] sm:$0xff]
    %v98 = vld [vmem:[#allocation5 + $0xd8] sm:$0xff]
    %v99 = vld [vmem:[#allocation5 + $0xe0] sm:$0xff]
    %v100 = vld [vmem:[#allocation5 + $0xe8] sm:$0xff]
    %v101 = vld [vmem:[#allocation5 + $0xf0] sm:$0xff]
    %v102 = vld [vmem:[#allocation5 + $0xf8] sm:$0xff]
    %v103 = vld [vmem:[#allocation5 + $0x100] sm:$0xff]
    %v104 = vld [vmem:[#allocation5 + $0x108] sm:$0xff]
    %v105 = vld [vmem:[#allocation5 + $0x110] sm:$0xff]
    %v106 = vld [vmem:[#allocation5 + $0x118] sm:$0xff]
    %v107 = vld [vmem:[#allocation5 + $0x120] sm:$0xff]
    %v108 = vld [vmem:[#allocation5 + $0x128] sm:$0xff]
    %v109 = vld [vmem:[#allocation5 + $0x130] sm:$0xff]
    %v110 = vld [vmem:[#allocation5 + $0x138] sm:$0xff]
    %v111 = vld [vmem:[#allocation5 + $0x140] sm:$0xff]
    %v112 = vld [vmem:[#allocation5 + $0x148] sm:$0xff]
    %v113 = vld [vmem:[#allocation5 + $0x150] sm:$0xff]
    %v114 = vld [vmem:[#allocation5 + $0x158] sm:$0xff]
    %v115 = vld [vmem:[#allocation5 + $0x160] sm:$0xff]
    %v116 = vld [vmem:[#allocation5 + $0x168] sm:$0xff]
    %v117 = vld [vmem:[#allocation5 + $0x170] sm:$0xff]
    %v118 = vld [vmem:[#allocation5 + $0x178] sm:$0xff]
    %v119 = vld [vmem:[#allocation5 + $0x180] sm:$0xff]
    %v120 = vld [vmem:[#allocation5 + $0x188] sm:$0xff]
    %v121 = vld [vmem:[#allocation5 + $0x190] sm:$0xff]
    %v122 = vld [vmem:[#allocation5 + $0x198] sm:$0xff]
    %v123 = vld [vmem:[#allocation5 + $0x1a0] sm:$0xff]
    %v124 = vld [vmem:[#allocation5 + $0x1a8] sm:$0xff]
    %v125 = vld [vmem:[#allocation5 + $0x1b0] sm:$0xff]
    %v126 = vld [vmem:[#allocation5 + $0x1b8] sm:$0xff]
    %v127 = vld [vmem:[#allocation5 + $0x1c0] sm:$0xff]
    %v128 = vld [vmem:[#allocation5 + $0x1c8] sm:$0xff]
    %v129 = vld [vmem:[#allocation5 + $0x1d0] sm:$0xff]
    %v130 = vld [vmem:[#allocation5 + $0x1d8] sm:$0xff]
    %v131 = vld [vmem:[#allocation5 + $0x1e0] sm:$0xff]
    %v132 = vld [vmem:[#allocation5 + $0x1e8] sm:$0xff]
    %v133 = vld [vmem:[#allocation5 + $0x1f0] sm:$0xff]
    %v134 = vld [vmem:[#allocation5 + $0x1f8] sm:$0xff]
    %v199 = vunpack.c.l.b16 %v71
    %v200 = vunpack.c.h.b16 %v71
    %v201 = vunpack.c.l.b16 %v72
    %v202 = vunpack.c.h.b16 %v72
    %v203 = vunpack.c.l.b16 %v73
    %v204 = vunpack.c.h.b16 %v73
    %v205 = vunpack.c.l.b16 %v74
    %v206 = vunpack.c.h.b16 %v74
    %v207 = vunpack.c.l.b16 %v75
    %v208 = vunpack.c.h.b16 %v75
    %v209 = vunpack.c.l.b16 %v76
    %v210 = vunpack.c.h.b16 %v76
    %v211 = vunpack.c.l.b16 %v77
    %v212 = vunpack.c.h.b16 %v77
    %v213 = vunpack.c.l.b16 %v78
    %v214 = vunpack.c.h.b16 %v78
    %v215 = vunpack.c.l.b16 %v79
    %v216 = vunpack.c.h.b16 %v79
    %v217 = vunpack.c.l.b16 %v80
    %v218 = vunpack.c.h.b16 %v80
    %v219 = vunpack.c.l.b16 %v81
    %v220 = vunpack.c.h.b16 %v81
    %v221 = vunpack.c.l.b16 %v82
    %v222 = vunpack.c.h.b16 %v82
    %v223 = vunpack.c.l.b16 %v83
    %v224 = vunpack.c.h.b16 %v83
    %v225 = vunpack.c.l.b16 %v84
    %v226 = vunpack.c.h.b16 %v84
    %v227 = vunpack.c.l.b16 %v85
    %v228 = vunpack.c.h.b16 %v85
    %v229 = vunpack.c.l.b16 %v86
    %v230 = vunpack.c.h.b16 %v86
    %v231 = vunpack.c.l.b16 %v87
    %v232 = vunpack.c.h.b16 %v87
    %v233 = vunpack.c.l.b16 %v88
    %v234 = vunpack.c.h.b16 %v88
    %v235 = vunpack.c.l.b16 %v89
    %v236 = vunpack.c.h.b16 %v89
    %v237 = vunpack.c.l.b16 %v90
    %v238 = vunpack.c.h.b16 %v90
    %v239 = vunpack.c.l.b16 %v91
    %v240 = vunpack.c.h.b16 %v91
    %v241 = vunpack.c.l.b16 %v92
    %v242 = vunpack.c.h.b16 %v92
    %v243 = vunpack.c.l.b16 %v93
    %v244 = vunpack.c.h.b16 %v93
    %v245 = vunpack.c.l.b16 %v94
    %v246 = vunpack.c.h.b16 %v94
    %v247 = vunpack.c.l.b16 %v95
    %v248 = vunpack.c.h.b16 %v95
    %v249 = vunpack.c.l.b16 %v96
    %v250 = vunpack.c.h.b16 %v96
    %v251 = vunpack.c.l.b16 %v97
    %v252 = vunpack.c.h.b16 %v97
    %v253 = vunpack.c.l.b16 %v98
    %v254 = vunpack.c.h.b16 %v98
    %v255 = vunpack.c.l.b16 %v99
    %v256 = vunpack.c.h.b16 %v99
    %v257 = vunpack.c.l.b16 %v100
    %v258 = vunpack.c.h.b16 %v100
    %v259 = vunpack.c.l.b16 %v101
    %v260 = vunpack.c.h.b16 %v101
    %v261 = vunpack.c.l.b16 %v102
    %v262 = vunpack.c.h.b16 %v102
    %v263 = vunpack.c.l.b16 %v103
    %v264 = vunpack.c.h.b16 %v103
    %v265 = vunpack.c.l.b16 %v104
    %v266 = vunpack.c.h.b16 %v104
    %v267 = vunpack.c.l.b16 %v105
    %v268 = vunpack.c.h.b16 %v105
    %v269 = vunpack.c.l.b16 %v106
    %v270 = vunpack.c.h.b16 %v106
    %v271 = vunpack.c.l.b16 %v107
    %v272 = vunpack.c.h.b16 %v107
    %v273 = vunpack.c.l.b16 %v108
    %v274 = vunpack.c.h.b16 %v108
    %v275 = vunpack.c.l.b16 %v109
    %v276 = vunpack.c.h.b16 %v109
    %v277 = vunpack.c.l.b16 %v110
    %v278 = vunpack.c.h.b16 %v110
    %v279 = vunpack.c.l.b16 %v111
    %v280 = vunpack.c.h.b16 %v111
    %v281 = vunpack.c.l.b16 %v112
    %v282 = vunpack.c.h.b16 %v112
    %v283 = vunpack.c.l.b16 %v113
    %v284 = vunpack.c.h.b16 %v113
    %v285 = vunpack.c.l.b16 %v114
    %v286 = vunpack.c.h.b16 %v114
    %v287 = vunpack.c.l.b16 %v115
    %v288 = vunpack.c.h.b16 %v115
    %v289 = vunpack.c.l.b16 %v116
    %v290 = vunpack.c.h.b16 %v116
    %v291 = vunpack.c.l.b16 %v117
    %v292 = vunpack.c.h.b16 %v117
    %v293 = vunpack.c.l.b16 %v118
    %v294 = vunpack.c.h.b16 %v118
    %v295 = vunpack.c.l.b16 %v119
    %v296 = vunpack.c.h.b16 %v119
    %v297 = vunpack.c.l.b16 %v120
    %v298 = vunpack.c.h.b16 %v120
    %v299 = vunpack.c.l.b16 %v121
    %v300 = vunpack.c.h.b16 %v121
    %v301 = vunpack.c.l.b16 %v122
    %v302 = vunpack.c.h.b16 %v122
    %v303 = vunpack.c.l.b16 %v123
    %v304 = vunpack.c.h.b16 %v123
    %v305 = vunpack.c.l.b16 %v124
    %v306 = vunpack.c.h.b16 %v124
    %v307 = vunpack.c.l.b16 %v125
    %v308 = vunpack.c.h.b16 %v125
    %v309 = vunpack.c.l.b16 %v126
    %v310 = vunpack.c.h.b16 %v126
    %v311 = vunpack.c.l.b16 %v127
    %v312 = vunpack.c.h.b16 %v127
    %v313 = vunpack.c.l.b16 %v128
    %v314 = vunpack.c.h.b16 %v128
    %v315 = vunpack.c.l.b16 %v129
    %v316 = vunpack.c.h.b16 %v129
    %v317 = vunpack.c.l.b16 %v130
    %v318 = vunpack.c.h.b16 %v130
    %v319 = vunpack.c.l.b16 %v131
    %v320 = vunpack.c.h.b16 %v131
    %v321 = vunpack.c.l.b16 %v132
    %v322 = vunpack.c.h.b16 %v132
    %v323 = vunpack.c.l.b16 %v133
    %v324 = vunpack.c.h.b16 %v133
    %v325 = vunpack.c.l.b16 %v134
    %v326 = vunpack.c.h.b16 %v134
    %v327 = vpack.c.b16 %v207, %v199
    %v328 = vpack.c.b16 %v208, %v200
    %v329 = vpack.c.b16 %v209, %v201
    %v330 = vpack.c.b16 %v210, %v202
    %v331 = vpack.c.b16 %v211, %v203
    %v332 = vpack.c.b16 %v212, %v204
    %v333 = vpack.c.b16 %v213, %v205
    %v334 = vpack.c.b16 %v214, %v206
    %v335 = vpack.c.b16 %v223, %v215
    %v336 = vpack.c.b16 %v224, %v216
    %v337 = vpack.c.b16 %v225, %v217
    %v338 = vpack.c.b16 %v226, %v218
    %v339 = vpack.c.b16 %v227, %v219
    %v340 = vpack.c.b16 %v228, %v220
    %v341 = vpack.c.b16 %v229, %v221
    %v342 = vpack.c.b16 %v230, %v222
    %v343 = vpack.c.b16 %v239, %v231
    %v344 = vpack.c.b16 %v240, %v232
    %v345 = vpack.c.b16 %v241, %v233
    %v346 = vpack.c.b16 %v242, %v234
    %v347 = vpack.c.b16 %v243, %v235
    %v348 = vpack.c.b16 %v244, %v236
    %v349 = vpack.c.b16 %v245, %v237
    %v350 = vpack.c.b16 %v246, %v238
    %v351 = vpack.c.b16 %v255, %v247
    %v352 = vpack.c.b16 %v256, %v248
    %v353 = vpack.c.b16 %v257, %v249
    %v354 = vpack.c.b16 %v258, %v250
    %v355 = vpack.c.b16 %v259, %v251
    %v356 = vpack.c.b16 %v260, %v252
    %v357 = vpack.c.b16 %v261, %v253
    %v358 = vpack.c.b16 %v262, %v254
    %v359 = vpack.c.b16 %v271, %v263
    %v360 = vpack.c.b16 %v272, %v264
    %v361 = vpack.c.b16 %v273, %v265
    %v362 = vpack.c.b16 %v274, %v266
    %v363 = vpack.c.b16 %v275, %v267
    %v364 = vpack.c.b16 %v276, %v268
    %v365 = vpack.c.b16 %v277, %v269
    %v366 = vpack.c.b16 %v278, %v270
    %v367 = vpack.c.b16 %v287, %v279
    %v368 = vpack.c.b16 %v288, %v280
    %v369 = vpack.c.b16 %v289, %v281
    %v370 = vpack.c.b16 %v290, %v282
    %v371 = vpack.c.b16 %v291, %v283
    %v372 = vpack.c.b16 %v292, %v284
    %v373 = vpack.c.b16 %v293, %v285
    %v374 = vpack.c.b16 %v294, %v286
    %v375 = vpack.c.b16 %v303, %v295
    %v376 = vpack.c.b16 %v304, %v296
    %v377 = vpack.c.b16 %v305, %v297
    %v378 = vpack.c.b16 %v306, %v298
    %v379 = vpack.c.b16 %v307, %v299
    %v380 = vpack.c.b16 %v308, %v300
    %v381 = vpack.c.b16 %v309, %v301
    %v382 = vpack.c.b16 %v310, %v302
    %v383 = vpack.c.b16 %v319, %v311
    %v384 = vpack.c.b16 %v320, %v312
    %v385 = vpack.c.b16 %v321, %v313
    %v386 = vpack.c.b16 %v322, %v314
    %v387 = vpack.c.b16 %v323, %v315
    %v388 = vpack.c.b16 %v324, %v316
    %v389 = vpack.c.b16 %v325, %v317
    %v390 = vpack.c.b16 %v326, %v318
    %455 = vmatpush.bf16.xpose.msra.mxu0 %v383
    %456 = vmatpush.bf16.xpose.msra.mxu0 %v375
    %457 = vmatpush.bf16.xpose.msra.mxu0 %v367
    %458 = vmatpush.bf16.xpose.msra.mxu0 %v359
    %459 = vmatpush.bf16.xpose.msra.mxu0 %v351
    %460 = vmatpush.bf16.xpose.msra.mxu0 %v343
    %461 = vmatpush.bf16.xpose.msra.mxu0 %v335
    %462 = vmatpush.bf16.xpose.msra.mxu0 %v327
    %463 = vmatmul.bf16.gmra.mxu0 %v63
    %v464 = vpop.f32.mrf.mxu0
    %v465 = vadd.f32 0.0, %v464
    %v466 = vpop.f32.mrf.mxu0
    %v467 = vadd.f32 0.0, %v466
    %468 = vdwg.mxu0
    %469 = vmatpush.bf16.xpose.msra.mxu0 %v384
    %470 = vmatpush.bf16.xpose.msra.mxu0 %v376
    %471 = vmatpush.bf16.xpose.msra.mxu0 %v368
    %472 = vmatpush.bf16.xpose.msra.mxu0 %v360
    %473 = vmatpush.bf16.xpose.msra.mxu0 %v352
    %474 = vmatpush.bf16.xpose.msra.mxu0 %v344
    %475 = vmatpush.bf16.xpose.msra.mxu0 %v336
    %476 = vmatpush.bf16.xpose.msra.mxu0 %v328
    %477 = vmatmul.bf16.gmra.mxu0 %v64
    %v478 = vpop.f32.mrf.mxu0
    %v479 = vadd.f32 %v465, %v478
    %v480 = vpop.f32.mrf.mxu0
    %v481 = vadd.f32 %v467, %v480
    %482 = vdwg.mxu0
    %483 = vmatpush.bf16.xpose.msra.mxu0 %v385
    %484 = vmatpush.bf16.xpose.msra.mxu0 %v377
    %485 = vmatpush.bf16.xpose.msra.mxu0 %v369
    %486 = vmatpush.bf16.xpose.msra.mxu0 %v361
    %487 = vmatpush.bf16.xpose.msra.mxu0 %v353
    %488 = vmatpush.bf16.xpose.msra.mxu0 %v345
    %489 = vmatpush.bf16.xpose.msra.mxu0 %v337
    %490 = vmatpush.bf16.xpose.msra.mxu0 %v329
    %491 = vmatmul.bf16.gmra.mxu0 %v65
    %v492 = vpop.f32.mrf.mxu0
    %v493 = vadd.f32 %v479, %v492
    %v494 = vpop.f32.mrf.mxu0
    %v495 = vadd.f32 %v481, %v494
    %496 = vdwg.mxu0
    %497 = vmatpush.bf16.xpose.msra.mxu0 %v386
    %498 = vmatpush.bf16.xpose.msra.mxu0 %v378
    %499 = vmatpush.bf16.xpose.msra.mxu0 %v370
    %500 = vmatpush.bf16.xpose.msra.mxu0 %v362
    %501 = vmatpush.bf16.xpose.msra.mxu0 %v354
    %502 = vmatpush.bf16.xpose.msra.mxu0 %v346
    %503 = vmatpush.bf16.xpose.msra.mxu0 %v338
    %504 = vmatpush.bf16.xpose.msra.mxu0 %v330
    %505 = vmatmul.bf16.gmra.mxu0 %v66
    %v506 = vpop.f32.mrf.mxu0
    %v507 = vadd.f32 %v493, %v506
    %v508 = vpop.f32.mrf.mxu0
    %v509 = vadd.f32 %v495, %v508
    %510 = vdwg.mxu0
    %511 = vmatpush.bf16.xpose.msra.mxu0 %v387
    %512 = vmatpush.bf16.xpose.msra.mxu0 %v379
    %513 = vmatpush.bf16.xpose.msra.mxu0 %v371
    %514 = vmatpush.bf16.xpose.msra.mxu0 %v363
    %515 = vmatpush.bf16.xpose.msra.mxu0 %v355
    %516 = vmatpush.bf16.xpose.msra.mxu0 %v347
    %517 = vmatpush.bf16.xpose.msra.mxu0 %v339
    %518 = vmatpush.bf16.xpose.msra.mxu0 %v331
    %519 = vmatmul.bf16.gmra.mxu0 %v67
    %v520 = vpop.f32.mrf.mxu0
    %v521 = vadd.f32 %v507, %v520
    %v522 = vpop.f32.mrf.mxu0
    %v523 = vadd.f32 %v509, %v522
    %524 = vdwg.mxu0
    %525 = vmatpush.bf16.xpose.msra.mxu0 %v388
    %526 = vmatpush.bf16.xpose.msra.mxu0 %v380
    %527 = vmatpush.bf16.xpose.msra.mxu0 %v372
    %528 = vmatpush.bf16.xpose.msra.mxu0 %v364
    %529 = vmatpush.bf16.xpose.msra.mxu0 %v356
    %530 = vmatpush.bf16.xpose.msra.mxu0 %v348
    %531 = vmatpush.bf16.xpose.msra.mxu0 %v340
    %532 = vmatpush.bf16.xpose.msra.mxu0 %v332
    %533 = vmatmul.bf16.gmra.mxu0 %v68
    %v534 = vpop.f32.mrf.mxu0
    %v535 = vadd.f32 %v521, %v534
    %v536 = vpop.f32.mrf.mxu0
    %v537 = vadd.f32 %v523, %v536
    %538 = vdwg.mxu0
    %539 = vmatpush.bf16.xpose.msra.mxu0 %v389
    %540 = vmatpush.bf16.xpose.msra.mxu0 %v381
    %541 = vmatpush.bf16.xpose.msra.mxu0 %v373
    %542 = vmatpush.bf16.xpose.msra.mxu0 %v365
    %543 = vmatpush.bf16.xpose.msra.mxu0 %v357
    %544 = vmatpush.bf16.xpose.msra.mxu0 %v349
    %545 = vmatpush.bf16.xpose.msra.mxu0 %v341
    %546 = vmatpush.bf16.xpose.msra.mxu0 %v333
    %547 = vmatmul.bf16.gmra.mxu0 %v69
    %v548 = vpop.f32.mrf.mxu0
    %v549 = vadd.f32 %v535, %v548
    %v550 = vpop.f32.mrf.mxu0
    %v551 = vadd.f32 %v537, %v550
    %552 = vdwg.mxu0
    %553 = vmatpush.bf16.xpose.msra.mxu0 %v390
    %554 = vmatpush.bf16.xpose.msra.mxu0 %v382
    %555 = vmatpush.bf16.xpose.msra.mxu0 %v374
    %556 = vmatpush.bf16.xpose.msra.mxu0 %v366
    %557 = vmatpush.bf16.xpose.msra.mxu0 %v358
    %558 = vmatpush.bf16.xpose.msra.mxu0 %v350
    %559 = vmatpush.bf16.xpose.msra.mxu0 %v342
    %560 = vmatpush.bf16.xpose.msra.mxu0 %v334
    %561 = vmatmul.bf16.gmra.mxu0 %v70
    %v562 = vpop.f32.mrf.mxu0
    %v563 = vadd.f32 %v549, %v562
    %v564 = vpop.f32.mrf.mxu0
    %v565 = vadd.f32 %v551, %v564
    %566 = vdwg.mxu0
    %p567 = scmp.eq.s32.totalorder 0, 0
    // Predicated region
    $region22: #{tpu_custom_call.1} parent=1 // pred_check
      %p568 = pneg %p567
    $region23: #{tpu_custom_call.1} parent=1 // pred_check_branch
      %570 = sbr.rel (%p568) target = $region25
    $region24: #{tpu_custom_call.1} parent=1 // pred_region
      %v571 = vld [vmem:[%s2] sm:$0x1]
      %v573 = vperm.slane %v571, 0
      %v575 = vadd.f32 %v563, %v573
      %v576 = vadd.f32 %v565, %v573
      %577 = vst [vmem:[#allocation7] sm:$0xff] %v575
      %578 = vst [vmem:[#allocation7 + $0x8] sm:$0xff] %v576
    $region25: #{tpu_custom_call.1} parent=1 // pred_fallthru
      _
    %p579 = scmp.gt.s32.totalorder 0, 0
    // Predicated region
    $region26: #{tpu_custom_call.1} parent=1 // pred_check
      %p580 = pneg %p579
    $region27: #{tpu_custom_call.1} parent=1 // pred_check_branch
      %582 = sbr.rel (%p580) target = $region29
    $region28: #{tpu_custom_call.1} parent=1 // pred_region
      %v583 = vld [vmem:[#allocation7] sm:$0xff]
      %v584 = vld [vmem:[#allocation7 + $0x8] sm:$0xff]
      %v585 = vadd.f32 %v583, %v563
      %v586 = vadd.f32 %v584, %v565
      %587 = vst [vmem:[#allocation7] sm:$0xff] %v585
      %588 = vst [vmem:[#allocation7 + $0x8] sm:$0xff] %v586
    $region29: #{tpu_custom_call.1} parent=1 // pred_fallthru
      _
    // Predicated region
    $region30: #{tpu_custom_call.1} parent=1 // pred_check
      _
    $region31: #{tpu_custom_call.1} parent=1 // pred_check_branch
      %590 = sbr.rel (0) target = $region33
    $region32: #{tpu_custom_call.1} parent=1 // pred_region
      %592 = vsyncadd [#allocation4], 0
      %s593 = sshll.u32 [#allocation7], 4
      %s594 = int_to_ptr.vmem [resolvable:$true] %s593
      %s595 = sshll.u32 %s3, 4
      %s596 = int_to_ptr.hbm [resolvable:$true] %s595
      %601 = dma.vmem_to_hbm [thread:$0]  %s594, 256, %s596, [#allocation4], 128, 128, 8
    $region33: #{tpu_custom_call.1} parent=1 // pred_fallthru
      _
    // Predicated region
    $region34: #{tpu_custom_call.1} parent=1 // pred_check
      _
    $region35: #{tpu_custom_call.1} parent=1 // pred_check_branch
      %603 = sbr.rel (0) target = $region37
    $region36: #{tpu_custom_call.1} parent=1 // pred_region
      %605 = dma.done [#allocation4], 256
    $region37: #{tpu_custom_call.1} parent=1 // pred_fallthru
      _
    %606 = vsyncpa [#allocation3], 1
    %607 = vsyncpa [#allocation6], 1
    %608 = vsyncpa [#allocation4], 1

</llo_original>
